<compile_context>
chip_gen: v6e
topology: v6e:2x2x1
jax: 0.10.0
libtpu: 0.0.40
codegen_flags: <defaults>
</compile_context>

<pallas_src>
import functools

import jax
import jax.numpy as jnp
from jax.experimental import pallas as pl
from jax.experimental.pallas import tpu as pltpu


# --------------------------------------------------------------------------- #
# Kernels
# --------------------------------------------------------------------------- #
def _stats_kernel(x_ref, sum_ref, sq_ref):
    """Pass 1: accumulate per-lane-column sum and sum-of-squares over row tiles.

    grid = (n_feature_tiles, n_row_tiles); the row axis is a reduction
    ("arbitrary", last), the feature axis is independent ("parallel").
    The (1, te) output blocks stay resident across the row axis.
    """
    i = pl.program_id(1)

    @pl.when(i == 0)
    def _():
        sum_ref[...] = jnp.zeros_like(sum_ref)
        sq_ref[...] = jnp.zeros_like(sq_ref)

    x = x_ref[...].astype(jnp.float32)                       # [tr, te]
    sum_ref[...] += jnp.sum(x, axis=0, keepdims=True)        # [1, te]
    sq_ref[...] += jnp.sum(x * x, axis=0, keepdims=True)     # [1, te]


def _apply_kernel(mean_ref, rstd_ref, alpha_ref, x_ref, o_ref):
    """Pass 2: normalize with precomputed (mean, rstd) and apply the Dice gate."""
    x = x_ref[...].astype(jnp.float32)                       # [tr, te]
    x_p = jax.nn.sigmoid((x - mean_ref[...]) * rstd_ref[...])
    alpha = alpha_ref[...].astype(jnp.float32)               # [1, te]
    # alpha*(1-x_p)*x + x_p*x  ==  x * (alpha + x_p*(1-alpha))
    o_ref[...] = (x * (alpha + x_p * (1.0 - alpha))).astype(o_ref.dtype)


# --------------------------------------------------------------------------- #
# Wrapper
# --------------------------------------------------------------------------- #
_DEF_BLOCK_ELEMS = 256 * 1024     # ~1 MiB f32 per x block -> well under scoped VMEM


def _round_up(a, b):
    return -(-a // b) * b


def _choose_lane_tile(width):
    """Largest lane tile (<=512, multiple of 128) dividing `width`, else full extent."""
    if width % 128 == 0:
        for cand in (512, 384, 256, 128):
            if width % cand == 0:
                return cand
    return width  # full-extent last dim is always legal


def _dice_2d(x, alpha_row, *, epsilon, block_elems=_DEF_BLOCK_ELEMS):
    """x: [R, E]; alpha_row: [1, E]. Returns Dice(x) with training-mode BN stats."""
    R, E = x.shape
    out_dtype = x.dtype

    # Small-E fast path: pack k = 128 // E replicas of the feature axis into the
    # lane dimension so each vreg row is fully utilized (E must be a power of 2).
    k = 128 // E if (E < 128 and 128 % E == 0) else 1
    width = k * E
    te = 128 if k > 1 else _choose_lane_tile(E)

    # Row tile: multiple of 8, sized so one f32 x-block is ~<= block_elems.
    rows_packed = -(-R // k)
    tr_cap = max(8, (block_elems // te) // 8 * 8)
    tr = min(tr_cap, _round_up(rows_packed, 8))
    rows_padded = _round_up(rows_packed, tr)
    total_rows = rows_padded * k

    if total_rows != R:
        # Zero rows are stats-neutral: they add 0 to sum / sumsq and we divide
        # by the true row count R below.
        x = jnp.pad(x, ((0, total_rows - R), (0, 0)))
    x2 = x.reshape(rows_padded, width) if k > 1 else x
    a2 = (jnp.tile(alpha_row, (1, k)) if k > 1 else alpha_row).reshape(1, width)

    n_e = width // te
    n_r = rows_padded // tr
    inv_n = 1.0 / float(R)

    # ---------------- pass 1: per-feature sum / sum-of-squares ---------------- #
    col_sum, col_sq = pl.pallas_call(
        _stats_kernel,
        out_shape=(jax.ShapeDtypeStruct((1, width), jnp.float32),
                   jax.ShapeDtypeStruct((1, width), jnp.float32)),
        grid_spec=pltpu.PrefetchScalarGridSpec(
            num_scalar_prefetch=0,
            grid=(n_e, n_r),
            in_specs=[pl.BlockSpec((tr, te), lambda j, i: (i, j))],
            out_specs=[pl.BlockSpec((1, te), lambda j, i: (0, j)),
                       pl.BlockSpec((1, te), lambda j, i: (0, j))],
        ),
        compiler_params=pltpu.CompilerParams(
            dimension_semantics=("parallel", "arbitrary")),
    )(x2)

    # ------------- tiny JAX glue: fold replicas, finalize mean/rstd ----------- #
    if k > 1:
        # lane column c holds feature (c % E); fold the k partial sums per feature
        # and broadcast them back to all replica positions.
        per_feat_sum = jnp.sum(col_sum.reshape(k, E), axis=0)
        per_feat_sq = jnp.sum(col_sq.reshape(k, E), axis=0)
        col_sum = jnp.tile(per_feat_sum, k).reshape(1, width)
        col_sq = jnp.tile(per_feat_sq, k).reshape(1, width)
    mean = col_sum * inv_n
    var = jnp.maximum(col_sq * inv_n - mean * mean, 0.0)     # one-pass variance
    rstd = jax.lax.rsqrt(var + epsilon)

    # ---------------- pass 2: normalize + Dice gate (fully parallel) ---------- #
    out2 = pl.pallas_call(
        _apply_kernel,
        out_shape=jax.ShapeDtypeStruct((rows_padded, width), out_dtype),
        grid_spec=pltpu.PrefetchScalarGridSpec(
            num_scalar_prefetch=0,
            grid=(n_e, n_r),
            in_specs=[pl.BlockSpec((1, te), lambda j, i: (0, j)),   # mean
                      pl.BlockSpec((1, te), lambda j, i: (0, j)),   # rstd
                      pl.BlockSpec((1, te), lambda j, i: (0, j)),   # alpha
                      pl.BlockSpec((tr, te), lambda j, i: (i, j))], # x
            out_specs=pl.BlockSpec((tr, te), lambda j, i: (i, j)),
        ),
        compiler_params=pltpu.CompilerParams(
            dimension_semantics=("parallel", "parallel")),
    )(mean, rstd, a2, x2)

    out = out2.reshape(rows_padded * k, E) if k > 1 else out2
    return out[:R]


def dice_forward(x, alpha, dim, *, epsilon=1e-8, block_elems=_DEF_BLOCK_ELEMS):
    """Pallas Dice forward.

    dim == 2: x [B, E],    alpha [E]
    dim == 3: x [B, N, E], alpha [E, 1]
    Returns an array of the same shape and dtype as x.
    """
    assert dim in (2, 3) and x.ndim == dim
    if dim == 2:
        return _dice_2d(x, alpha.reshape(1, -1),
                        epsilon=epsilon, block_elems=block_elems)
    B, N, E = x.shape
    # BN over channel E with stats over (B, N)  ==  dim-2 Dice on [B*N, E].
    out2 = _dice_2d(x.reshape(B * N, E), alpha.reshape(1, E),
                    epsilon=epsilon, block_elems=block_elems)
    return out2.reshape(B, N, E)


# --------------------------------------------------------------------------- #
# Pure-JAX reference (matches the PyTorch module in training mode)
# --------------------------------------------------------------------------- #
def _dice_reference(x, alpha, dim, epsilon=1e-8):
    if dim == 2:
        mean = jnp.mean(x, axis=0, keepdims=True)
        var = jnp.mean((x - mean) ** 2, axis=0, keepdims=True)
        x_p = jax.nn.sigmoid((x - mean) / jnp.sqrt(var + epsilon))
        return alpha.reshape(1, -1) * (1 - x_p) * x + x_p * x
    xt = jnp.transpose(x, (0, 2, 1))                           # [B, E, N]
    mean = jnp.mean(xt, axis=(0, 2), keepdims=True)
    var = jnp.mean((xt - mean) ** 2, axis=(0, 2), keepdims=True)
    x_p = jax.nn.sigmoid((xt - mean) / jnp.sqrt(var + epsilon))
    out = alpha.reshape(1, -1, 1) * (1 - x_p) * xt + x_p * xt
    return jnp.transpose(out, (0, 2, 1))


if __name__ == "__main__":
    key = jax.random.PRNGKey(0)
    ks = jax.random.split(key, 10)

    # ---- dim == 2, small-E packed path (E=32 -> 4 replicas per 128-lane vreg) ----
    B, E = 8, 32
    x2 = jax.random.normal(ks[0], (B, E), dtype=jnp.float32)
    alpha2 = 0.25 * jax.random.normal(ks[1], (E,), dtype=jnp.float32)
    out2 = jax.block_until_ready(dice_forward(x2, alpha2, dim=2))
    ref2 = _dice_reference(x2, alpha2, dim=2)
    assert out2.shape == x2.shape and out2.dtype == x2.dtype
    assert jnp.allclose(out2, ref2, atol=1e-5, rtol=1e-5)

    # ---- dim == 3 (stats over batch and num_features) ----
    B3, N3, E3 = 2, 8, 32
    x3 = jax.random.normal(ks[2], (B3, N3, E3), dtype=jnp.float32)
    alpha3 = 0.25 * jax.random.normal(ks[3], (E3, 1), dtype=jnp.float32)
    out3 = jax.block_until_ready(dice_forward(x3, alpha3, dim=3))
    ref3 = _dice_reference(x3, alpha3, dim=3)
    assert out3.shape == x3.shape and out3.dtype == x3.dtype
    assert jnp.allclose(out3, ref3, atol=1e-5, rtol=1e-5)

    # ---- generic path, E multiple of 128, tiny block to exercise feature tiling
    #      + multi-row-tile accumulation ----
    R4, E4 = 40, 640
    x4 = jax.random.normal(ks[4], (R4, E4), dtype=jnp.float32)
    alpha4 = 0.25 * jax.random.normal(ks[5], (E4,), dtype=jnp.float32)
    out4 = jax.block_until_ready(
        dice_forward(x4, alpha4, dim=2, block_elems=8 * 128))
    ref4 = _dice_reference(x4, alpha4, dim=2)
    assert jnp.allclose(out4, ref4, atol=1e-5, rtol=1e-5)

    # ---- packed path with row padding + multiple row tiles (R % k != 0) ----
    R5, E5 = 100, 32
    x5 = jax.random.normal(ks[6], (R5, E5), dtype=jnp.float32)
    alpha5 = 0.25 * jax.random.normal(ks[7], (E5,), dtype=jnp.float32)
    out5 = jax.block_until_ready(
        dice_forward(x5, alpha5, dim=2, block_elems=8 * 128))
    ref5 = _dice_reference(x5, alpha5, dim=2)
    assert jnp.allclose(out5, ref5, atol=1e-5, rtol=1e-5)

    # ---- generic path, E not a multiple of 128 and not packable (full-extent lanes) ----
    R6, E6 = 16, 96
    x6 = jax.random.normal(ks[8], (R6, E6), dtype=jnp.float32)
    alpha6 = 0.25 * jax.random.normal(ks[9], (E6,), dtype=jnp.float32)
    out6 = jax.block_until_ready(dice_forward(x6, alpha6, dim=2))
    ref6 = _dice_reference(x6, alpha6, dim=2)
    assert jnp.allclose(out6, ref6, atol=1e-5, rtol=1e-5)

    print("KERNEL_OK")
</pallas_src>

<mosaic_0001>
module attributes {stable_mosaic.version = 11 : i64} {
  func.func @_stats_kernel(%arg0: i32, %arg1: i32, %arg2: memref<8x128xf32, #tpu.memory_space<vmem>>, %arg3: memref<1x128xf32, #tpu.memory_space<vmem>>, %arg4: memref<1x128xf32, #tpu.memory_space<vmem>>) attributes {dimension_semantics = [#tpu.dimension_semantics<parallel>, #tpu.dimension_semantics<arbitrary>], iteration_bounds = array<i64: 1, 1>, scalar_prefetch = 0 : i64, scratch_operands = 0 : i64, tpu.core_type = #tpu.core_type<tc>, window_params = [{transform_indices = @transform_0, window_bounds = array<i64: 8, 128>}, {transform_indices = @transform_1, window_bounds = array<i64: 1, 128>}, {transform_indices = @transform_2, window_bounds = array<i64: 1, 128>}]} {
    %c0_i32 = arith.constant 0 : i32
    %0 = arith.cmpi eq, %arg1, %c0_i32 : i32
    %1 = arith.extui %0 : i1 to i32
    %c0_i32_0 = arith.constant 0 : i32
    %2 = arith.cmpi ne, %1, %c0_i32_0 : i32
    scf.if %2 {
      %cst_11 = arith.constant 0.000000e+00 : f32
      %15 = vector.broadcast %cst_11 : f32 to vector<1x128xf32>
      %c0_12 = arith.constant 0 : index
      %c0_13 = arith.constant 0 : index
      %16 = vector.load %arg3[%c0_12, %c0_13] : memref<1x128xf32, #tpu.memory_space<vmem>>, vector<1x128xf32>
      tpu.vector_store %arg3[%c0_12, %c0_13], %15 {strides = array<i32>} : memref<1x128xf32, #tpu.memory_space<vmem>>, vector<1x128xf32>,
      %cst_14 = arith.constant 0.000000e+00 : f32
      %17 = vector.broadcast %cst_14 : f32 to vector<1x128xf32>
      %c0_15 = arith.constant 0 : index
      %c0_16 = arith.constant 0 : index
      %18 = vector.load %arg4[%c0_15, %c0_16] : memref<1x128xf32, #tpu.memory_space<vmem>>, vector<1x128xf32>
      tpu.vector_store %arg4[%c0_15, %c0_16], %17 {strides = array<i32>} : memref<1x128xf32, #tpu.memory_space<vmem>>, vector<1x128xf32>,
    } else {
    }
    %c0 = arith.constant 0 : index
    %c0_1 = arith.constant 0 : index
    %3 = vector.load %arg2[%c0, %c0_1] : memref<8x128xf32, #tpu.memory_space<vmem>>, vector<8x128xf32>
    %c0_2 = arith.constant 0 : index
    %c0_3 = arith.constant 0 : index
    %4 = vector.load %arg3[%c0_2, %c0_3] : memref<1x128xf32, #tpu.memory_space<vmem>>, vector<1x128xf32>
    %cst = arith.constant dense<0.000000e+00> : vector<128xf32>
    %5 = vector.multi_reduction <add>, %3, %cst [0] : vector<8x128xf32> to vector<128xf32>
    %6 = vector.shape_cast %5 : vector<128xf32> to vector<1x128xf32>
    %7 = arith.addf %4, %6 : vector<1x128xf32>
    %c0_4 = arith.constant 0 : index
    %c0_5 = arith.constant 0 : index
    %8 = vector.load %arg3[%c0_4, %c0_5] : memref<1x128xf32, #tpu.memory_space<vmem>>, vector<1x128xf32>
    tpu.vector_store %arg3[%c0_4, %c0_5], %7 {strides = array<i32>} : memref<1x128xf32, #tpu.memory_space<vmem>>, vector<1x128xf32>,
    %c0_6 = arith.constant 0 : index
    %c0_7 = arith.constant 0 : index
    %9 = vector.load %arg4[%c0_6, %c0_7] : memref<1x128xf32, #tpu.memory_space<vmem>>, vector<1x128xf32>
    %10 = arith.mulf %3, %3 : vector<8x128xf32>
    %cst_8 = arith.constant dense<0.000000e+00> : vector<128xf32>
    %11 = vector.multi_reduction <add>, %10, %cst_8 [0] : vector<8x128xf32> to vector<128xf32>
    %12 = vector.shape_cast %11 : vector<128xf32> to vector<1x128xf32>
    %13 = arith.addf %9, %12 : vector<1x128xf32>
    %c0_9 = arith.constant 0 : index
    %c0_10 = arith.constant 0 : index
    %14 = vector.load %arg4[%c0_9, %c0_10] : memref<1x128xf32, #tpu.memory_space<vmem>>, vector<1x128xf32>
    tpu.vector_store %arg4[%c0_9, %c0_10], %13 {strides = array<i32>} : memref<1x128xf32, #tpu.memory_space<vmem>>, vector<1x128xf32>,
    return
  }
  func.func @transform_0(%arg0: i32, %arg1: i32) -> (i32, i32) {
    %c0_i32 = arith.constant 0 : i32
    return %arg1, %arg0 : i32, i32
  }
  func.func @transform_1(%arg0: i32, %arg1: i32) -> (i32, i32) {
    %c0_i32 = arith.constant 0 : i32
    %c0_i32_0 = arith.constant 0 : i32
    return %c0_i32, %arg0 : i32, i32
  }
  func.func @transform_2(%arg0: i32, %arg1: i32) -> (i32, i32) {
    %c0_i32 = arith.constant 0 : i32
    %c0_i32_0 = arith.constant 0 : i32
    return %c0_i32, %arg0 : i32, i32
  }
}

</mosaic_0001>

<llo_original>
// kernel: tpu_custom_call.1
$region0: #{tpu_custom_call.1}
  #allocation0 [shape = 'u32[]', space=smem, size = 0x4, offset = 0x4, fixed_abs, tag = 'smem constant byte address 0x4 - core index']
  #allocation1 [shape = 'u32[144,128]{1,0:T(1,128)}', space=vmem, size = 0x12000, scoped, tag = 'internal scratch']
  %s0 = inlined_call_operand.hbm [shape: f32[8,128], index: 0, kind: input, shape index: {}]
  %s1 = inlined_call_operand.hbm [shape: f32[1,128], index: 1, kind: output, shape index: {0}]
  %s2 = inlined_call_operand.hbm [shape: f32[1,128], index: 2, kind: output, shape index: {1}]
  %3 = xla_tuple %s1, %s2
  %s4 = sld [smem:[#allocation0]]
  $region30: #{tpu_custom_call.1} parent=0
    _
  %s6 = ssub.s32 1, %s4
  %s7 = scalar_select 0, %s6, %s4
  $region1: #{tpu_custom_call.1} parent=0
    #allocation2 [shape = 'u8[4096]{0}', space=vmem, size = 0x1000, scoped, tag = 'input window, operand 0, single buffered']
    #allocation3 [shape = 's32[1]{0}', space=sflag, size = 0x4, scoped, tag = 'scoped memory for tpu_custom_call.1']
    #allocation4 [shape = 's32[1]{0}', space=sflag, size = 0x4, scoped, tag = 'scoped memory for tpu_custom_call.1']
    #allocation5 [shape = 'u8[512]{0}', space=vmem, size = 0x400, scoped, tag = 'output window, operand 0, single buffered']
    #allocation6 [shape = 'u8[512]{0}', space=vmem, size = 0x400, scoped, tag = 'output window, operand 1, single buffered']
    #allocation7 [shape = 's32[1]{0}', space=sflag, size = 0x4, scoped, tag = 'scoped memory for tpu_custom_call.1']
    %8 = vsyncpa [#allocation3], 0
    %9 = vsyncpa [#allocation4], 0
    %10 = vsyncpa [#allocation7], 0
    // Predicated region
    $region2: #{tpu_custom_call.1} parent=1 // pred_check
      _
    $region3: #{tpu_custom_call.1} parent=1 // pred_check_branch
      %12 = sbr.rel (0) target = $region5
    $region4: #{tpu_custom_call.1} parent=1 // pred_region
      %s14 = ssub.s32 128, 128
      %15 = vsyncadd [#allocation3], %s14
      %s17 = sshll.u32 [#allocation2], 4
      %s18 = int_to_ptr.vmem [resolvable:$true] %s17
      %20 = dma.hbm_to_vmem [thread:$0]  %s0, 128, %s18, [#allocation3]
    $region5: #{tpu_custom_call.1} parent=1 // pred_fallthru
      _
    // Predicated region
    $region6: #{tpu_custom_call.1} parent=1 // pred_check
      _
    $region7: #{tpu_custom_call.1} parent=1 // pred_check_branch
      %22 = sbr.rel (0) target = $region9
    $region8: #{tpu_custom_call.1} parent=1 // pred_region
      %23 = dma.done [#allocation3], 128
    $region9: #{tpu_custom_call.1} parent=1 // pred_fallthru
      _
    %p24 = scmp.eq.s32.totalorder 0, 0
    // Predicated region
    $region10: #{tpu_custom_call.1} parent=1 // pred_check
      %p25 = pneg %p24
    $region11: #{tpu_custom_call.1} parent=1 // pred_check_branch
      %27 = sbr.rel (%p25) target = $region13
    $region12: #{tpu_custom_call.1} parent=1 // pred_region
      %28 = vst [vmem:[#allocation5] sm:$0x1] 0.0
      %29 = vst [vmem:[#allocation6] sm:$0x1] 0.0
    $region13: #{tpu_custom_call.1} parent=1 // pred_fallthru
      _
    %v30 = vld [vmem:[#allocation2] sm:$0xff]
    %v31 = vld [vmem:[#allocation5] sm:$0x1]
    %v32 = vrot.slane %v30, 4
    %v33 = vadd.f32 %v30, %v32
    %v34 = vrot.slane %v33, 2
    %v35 = vadd.f32 %v33, %v34
    %v36 = vrot.slane %v35, 1
    %v37 = vadd.f32 %v35, %v36
    %v38 = vadd.f32 %v31, %v37
    %39 = vst [vmem:[#allocation5] sm:$0x1] %v38
    %v40 = vld [vmem:[#allocation6] sm:$0x1]
    %v41 = vmul.f32 %v30, %v30
    %v42 = vrot.slane %v41, 4
    %v43 = vadd.f32 %v41, %v42
    %v44 = vrot.slane %v43, 2
    %v45 = vadd.f32 %v43, %v44
    %v46 = vrot.slane %v45, 1
    %v47 = vadd.f32 %v45, %v46
    %v48 = vadd.f32 %v40, %v47
    %49 = vst [vmem:[#allocation6] sm:$0x1] %v48
    // Predicated region
    $region14: #{tpu_custom_call.1} parent=1 // pred_check
      _
    $region15: #{tpu_custom_call.1} parent=1 // pred_check_branch
      %51 = sbr.rel (0) target = $region17
    $region16: #{tpu_custom_call.1} parent=1 // pred_region
      %s53 = ssub.s32 16, 16
      %54 = vsyncadd [#allocation4], %s53
      %s56 = sshll.u32 [#allocation5], 4
      %s57 = int_to_ptr.vmem [resolvable:$true] %s56
      %59 = dma.vmem_to_hbm [thread:$0]  %s57, 16, %s1, [#allocation4]
    $region17: #{tpu_custom_call.1} parent=1 // pred_fallthru
      _
    // Predicated region
    $region18: #{tpu_custom_call.1} parent=1 // pred_check
      _
    $region19: #{tpu_custom_call.1} parent=1 // pred_check_branch
      %61 = sbr.rel (0) target = $region21
    $region20: #{tpu_custom_call.1} parent=1 // pred_region
      %s63 = ssub.s32 16, 16
      %64 = vsyncadd [#allocation7], %s63
      %s66 = sshll.u32 [#allocation6], 4
      %s67 = int_to_ptr.vmem [resolvable:$true] %s66
      %69 = dma.vmem_to_hbm [thread:$0]  %s67, 16, %s2, [#allocation7]
    $region21: #{tpu_custom_call.1} parent=1 // pred_fallthru
      _
    // Predicated region
    $region22: #{tpu_custom_call.1} parent=1 // pred_check
      _
    $region23: #{tpu_custom_call.1} parent=1 // pred_check_branch
      %71 = sbr.rel (0) target = $region25
    $region24: #{tpu_custom_call.1} parent=1 // pred_region
      %72 = dma.done [#allocation4], 16
    $region25: #{tpu_custom_call.1} parent=1 // pred_fallthru
      _
    // Predicated region
    $region26: #{tpu_custom_call.1} parent=1 // pred_check
      _
    $region27: #{tpu_custom_call.1} parent=1 // pred_check_branch
      %74 = sbr.rel (0) target = $region29
    $region28: #{tpu_custom_call.1} parent=1 // pred_region
      %75 = dma.done [#allocation7], 16
    $region29: #{tpu_custom_call.1} parent=1 // pred_fallthru
      _
    %76 = vsyncpa [#allocation3], 1
    %77 = vsyncpa [#allocation4], 1
    %78 = vsyncpa [#allocation7], 1

</llo_original>
